<compile_context>
chip_gen: v5e
topology: v5e:2x2
jax: 0.10.0
libtpu: 0.0.40
codegen_flags: <defaults>
</compile_context>

<pallas_src>
import functools

import jax
import jax.numpy as jnp
from jax.experimental import pallas as pl
from jax.experimental.pallas import tpu as pltpu

D_INP = 4  # fixed by the module spec


def _linear_nobias_kernel(x_ref, w_ref, o_ref, *, k_dim, use_vpu):
    if use_vpu:
        # Tiny K (=4): 4 VPU broadcast FMAs, no MXU push/pop or K padding.
        x = x_ref[...]
        w = w_ref[...]
        acc = x[:, 0:1] * w[0:1, :]
        for k in range(1, k_dim):
            acc = acc + x[:, k:k + 1] * w[k:k + 1, :]
        o_ref[...] = acc.astype(o_ref.dtype)
    else:
        # Packed path: K = 4*P, output block is 128-lane dense; one MXU matmul
        # with f32 accumulation (kernel is memory-bound, MXU has slack).
        o_ref[...] = jnp.dot(
            x_ref[...], w_ref[...], preferred_element_type=jnp.float32
        ).astype(o_ref.dtype)


def time_feature_embedding(x, weight, *, tm=1024, out_dtype=None):
    """x: (batch, seq, 4) ; weight: (4, embedding_size) -> (batch, seq, embedding_size).

    Equivalent to PyTorch nn.Linear(4, E, bias=False) (weight stored transposed,
    so the kernel computes x @ W == x @ W_torch.T).
    """
    b, s, d_inp = x.shape
    assert d_inp == D_INP and weight.shape[0] == D_INP
    emb = weight.shape[1]
    out_dtype = x.dtype if out_dtype is None else out_dtype

    # Row-packing factor: P consecutive rows share one 128-lane super-row.
    pack = 128 // emb if (emb < 128 and 128 % emb == 0) else 1
    use_vpu = (pack == 1)

    m = b * s
    row_quantum = 8 * pack                    # super-rows must be a multiple of 8
    tm = max(tm - tm % row_quantum, row_quantum)
    tm_eff = min(tm, pl.cdiv(m, row_quantum) * row_quantum)   # shrink for tiny M
    m_pad = pl.cdiv(m, tm_eff) * tm_eff
    grid_m = m_pad // tm_eff

    x2d = x.reshape(m, D_INP)
    if m_pad != m:
        x2d = jnp.pad(x2d, ((0, m_pad - m), (0, 0)))

    # Contiguous (row-major) re-views: pure layout plumbing, no data reordering.
    x_super = x2d.reshape(m_pad // pack, pack * D_INP)
    # Block-diagonal packed weight (4P, P*emb); identity for pack == 1.
    w_pack = jnp.kron(jnp.eye(pack, dtype=weight.dtype), weight)

    k_dim = pack * D_INP
    n_out = pack * emb
    tm_super = tm_eff // pack

    out_super = pl.pallas_call(
        functools.partial(_linear_nobias_kernel, k_dim=k_dim, use_vpu=use_vpu),
        out_shape=jax.ShapeDtypeStruct((m_pad // pack, n_out), out_dtype),
        grid=(grid_m,),
        in_specs=[
            pl.BlockSpec((tm_super, k_dim), lambda i: (i, 0)),
            pl.BlockSpec((k_dim, n_out), lambda i: (0, 0)),   # stays VMEM-resident
        ],
        out_specs=pl.BlockSpec((tm_super, n_out), lambda i: (i, 0)),
        compiler_params=pltpu.CompilerParams(
            dimension_semantics=("parallel",),   # megacore sharding on v7x
        ),
    )(x_super, w_pack)

    out2d = out_super.reshape(m_pad, emb)[:m]
    return out2d.reshape(b, s, emb)


if __name__ == "__main__":
    key = jax.random.PRNGKey(0)

    def check(batch, seq, embedding_size, k):
        kx, kw = jax.random.split(k)
        bound = 1.0 / (D_INP ** 0.5)
        # PyTorch nn.Linear weight is (emb, 4); we store the transpose (4, emb).
        w_torch = jax.random.uniform(
            kw, (embedding_size, D_INP), minval=-bound, maxval=bound,
            dtype=jnp.float32)
        w = w_torch.T
        x = jax.random.normal(kx, (batch, seq, D_INP), dtype=jnp.float32)

        out = jax.block_until_ready(time_feature_embedding(x, w))
        ref = jnp.einsum("bsd,de->bse", x, w)
        assert out.shape == (batch, seq, embedding_size)
        assert jnp.allclose(out, ref, atol=1e-5, rtol=1e-5)

    k1, k2, k3 = jax.random.split(key, 3)
    # Small shape from the module spec: lane-dense packed path (emb=32 -> P=4).
    check(2, 8, 32, k1)
    # Lane-aligned embedding: unpacked VPU broadcast-FMA path.
    check(2, 8, 128, k2)
    # Multi-tile grid with a ragged row count (exercises remainder padding).
    check(3, 700, 32, k3)

    print("KERNEL_OK")
</pallas_src>

<mosaic_0001>
module attributes {stable_mosaic.version = 11 : i64} {
  func.func @_linear_nobias_kernel(%arg0: i32, %arg1: memref<8x16xf32, #tpu.memory_space<vmem>>, %arg2: memref<16x128xf32, #tpu.memory_space<vmem>>, %arg3: memref<8x128xf32, #tpu.memory_space<vmem>>) attributes {dimension_semantics = [#tpu.dimension_semantics<parallel>], iteration_bounds = array<i64: 1>, scalar_prefetch = 0 : i64, scratch_operands = 0 : i64, tpu.core_type = #tpu.core_type<tc>, window_params = [{transform_indices = @transform_0, window_bounds = array<i64: 8, 16>}, {pipeline_mode = #tpu.pipeline_mode<synchronous>, transform_indices = @transform_1, window_bounds = array<i64: 16, 128>}, {transform_indices = @transform_2, window_bounds = array<i64: 8, 128>}]} {
    %c0 = arith.constant 0 : index
    %c0_0 = arith.constant 0 : index
    %0 = vector.load %arg1[%c0, %c0_0] : memref<8x16xf32, #tpu.memory_space<vmem>>, vector<8x16xf32>
    %c0_1 = arith.constant 0 : index
    %c0_2 = arith.constant 0 : index
    %1 = vector.load %arg2[%c0_1, %c0_2] : memref<16x128xf32, #tpu.memory_space<vmem>>, vector<16x128xf32>
    %cst = arith.constant dense<0.000000e+00> : vector<8x128xf32>
    %2 = tpu.matmul %0, %1, %cst {dimension_numbers = #tpu.dot_dimension_numbers<[1], [0], [0], [1], [0, 0, 1, 1], [], []>} : vector<8x16xf32>, vector<16x128xf32>, vector<8x128xf32> -> vector<8x128xf32>
    %c0_3 = arith.constant 0 : index
    %c0_4 = arith.constant 0 : index
    %3 = vector.load %arg3[%c0_3, %c0_4] : memref<8x128xf32, #tpu.memory_space<vmem>>, vector<8x128xf32>
    tpu.vector_store %arg3[%c0_3, %c0_4], %2 {strides = array<i32>} : memref<8x128xf32, #tpu.memory_space<vmem>>, vector<8x128xf32>,
    return
  }
  func.func @transform_0(%arg0: i32) -> (i32, i32) {
    %c0_i32 = arith.constant 0 : i32
    %c0_i32_0 = arith.constant 0 : i32
    return %arg0, %c0_i32 : i32, i32
  }
  func.func @transform_1(%arg0: i32) -> (i32, i32) {
    %c0_i32 = arith.constant 0 : i32
    %c0_i32_0 = arith.constant 0 : i32
    %c0_i32_1 = arith.constant 0 : i32
    return %c0_i32, %c0_i32_0 : i32, i32
  }
  func.func @transform_2(%arg0: i32) -> (i32, i32) {
    %c0_i32 = arith.constant 0 : i32
    %c0_i32_0 = arith.constant 0 : i32
    return %arg0, %c0_i32 : i32, i32
  }
}

</mosaic_0001>

<llo_original>
// kernel: tpu_custom_call.1
$region0: #{tpu_custom_call.1}
  #allocation0 [shape = 'u32[]', space=smem, size = 0x4, offset = 0x4, fixed_abs, tag = 'smem constant byte address 0x4 - core index']
  #allocation1 [shape = 'u32[72,128]{1,0:T(1,128)}', space=vmem, size = 0x9000, scoped, tag = 'internal scratch']
  %s0 = inlined_call_operand.hbm [shape: f32[8,16], index: 0, kind: input, shape index: {}]
  %s1 = inlined_call_operand.hbm [shape: f32[16,128], index: 1, kind: input, shape index: {}]
  %s2 = inlined_call_operand.hbm [shape: f32[8,128], index: 2, kind: output, shape index: {}]
  %s3 = sld [smem:[#allocation0]]
  $region26: #{tpu_custom_call.1} parent=0
    _
  %s5 = ssub.s32 1, %s3
  %s6 = scalar_select 0, %s5, %s3
  $region1: #{tpu_custom_call.1} parent=0
    #allocation2 [shape = 'u8[4096]{0}', space=vmem, size = 0x1000, scoped, tag = 'input window, operand 0, single buffered']
    #allocation3 [shape = 's32[1]{0}', space=sflag, size = 0x4, scoped, tag = 'scoped memory for tpu_custom_call.1']
    #allocation4 [shape = 's32[1]{0}', space=sflag, size = 0x4, scoped, tag = 'scoped memory for tpu_custom_call.1']
    #allocation5 [shape = 'u8[8192]{0}', space=vmem, size = 0x2000, scoped, tag = 'input window, operand 1, single buffered']
    #allocation6 [shape = 's32[1]{0}', space=sflag, size = 0x4, scoped, tag = 'scoped memory for tpu_custom_call.1']
    #allocation7 [shape = 'u8[4096]{0}', space=vmem, size = 0x1000, scoped, tag = 'output window, operand 0, single buffered']
    %7 = vsyncpa [#allocation3], 0
    %8 = vsyncpa [#allocation6], 0
    %9 = vsyncpa [#allocation4], 0
    // Predicated region
    $region2: #{tpu_custom_call.1} parent=1 // pred_check
      _
    $region3: #{tpu_custom_call.1} parent=1 // pred_check_branch
      %11 = sbr.rel (0) target = $region5
    $region4: #{tpu_custom_call.1} parent=1 // pred_region
      %13 = vsyncadd [#allocation3], 0
      %s15 = sshll.u32 %s0, 4
      %s16 = int_to_ptr.hbm [resolvable:$true] %s15
      %s17 = sshll.u32 [#allocation2], 4
      %s18 = int_to_ptr.vmem [resolvable:$true] %s17
      %20 = dma.hbm_to_vmem [thread:$0]  %s16, 128, %s18, [#allocation3]
    $region5: #{tpu_custom_call.1} parent=1 // pred_fallthru
      _
    // Predicated region
    $region6: #{tpu_custom_call.1} parent=1 // pred_check
      _
    $region7: #{tpu_custom_call.1} parent=1 // pred_check_branch
      %22 = sbr.rel (0) target = $region9
    $region8: #{tpu_custom_call.1} parent=1 // pred_region
      %24 = vsyncadd [#allocation6], 0
      %s25 = sshll.u32 %s1, 4
      %s26 = int_to_ptr.hbm [resolvable:$true] %s25
      %s27 = sshll.u32 [#allocation5], 4
      %s28 = int_to_ptr.vmem [resolvable:$true] %s27
      %33 = dma.hbm_to_vmem [thread:$0]  %s26, 256, %s28, [#allocation6], 128, 128, 8
    $region9: #{tpu_custom_call.1} parent=1 // pred_fallthru
      _
    // Predicated region
    $region10: #{tpu_custom_call.1} parent=1 // pred_check
      _
    $region11: #{tpu_custom_call.1} parent=1 // pred_check_branch
      %35 = sbr.rel (0) target = $region13
    $region12: #{tpu_custom_call.1} parent=1 // pred_region
      %37 = dma.done [#allocation3], 128
    $region13: #{tpu_custom_call.1} parent=1 // pred_fallthru
      _
    // Predicated region
    $region14: #{tpu_custom_call.1} parent=1 // pred_check
      _
    $region15: #{tpu_custom_call.1} parent=1 // pred_check_branch
      %39 = sbr.rel (0) target = $region17
    $region16: #{tpu_custom_call.1} parent=1 // pred_region
      %41 = dma.done [#allocation6], 256
    $region17: #{tpu_custom_call.1} parent=1 // pred_fallthru
      _
    %v42 = vld [vmem:[#allocation2] sm:$0xff]
    %v43 = vld [vmem:[#allocation5] sm:$0xff]
    %v44 = vld [vmem:[#allocation5 + $0x8] sm:$0xff]
    %vm45 = vcmask 130048
    %v47 = vsel %vm45, %v42, 0
    %49 = vmatpush.msra.mxu0 0.0
    %50 = vmatpush.msra.mxu0 0.0
    %51 = vmatpush.msra.mxu0 0.0
    %52 = vmatpush.msra.mxu0 0.0
    %53 = vmatpush.msra.mxu0 0.0
    %54 = vmatpush.msra.mxu0 0.0
    %55 = vmatpush.msra.mxu0 0.0
    %56 = vmatpush.msra.mxu0 0.0
    %57 = vmatpush.msra.mxu0 0.0
    %58 = vmatpush.msra.mxu0 0.0
    %59 = vmatpush.msra.mxu0 0.0
    %60 = vmatpush.msra.mxu0 0.0
    %61 = vmatpush.msra.mxu0 0.0
    %62 = vmatpush.msra.mxu0 0.0
    %63 = vmatpush.msra.mxu0 %v44
    %64 = vmatpush.msra.mxu0 %v43
    %65 = vmatmul.f32.gmra.mxu0 %v47
    %v66 = vpop.f32.mrf.mxu0
    %v67 = vadd.f32 0.0, %v66
    %68 = vdwg.mxu0
    %69 = vst [vmem:[#allocation7] sm:$0xff] %v67
    // Predicated region
    $region18: #{tpu_custom_call.1} parent=1 // pred_check
      _
    $region19: #{tpu_custom_call.1} parent=1 // pred_check_branch
      %71 = sbr.rel (0) target = $region21
    $region20: #{tpu_custom_call.1} parent=1 // pred_region
      %73 = vsyncadd [#allocation4], 0
      %s75 = sshll.u32 [#allocation7], 4
      %s76 = int_to_ptr.vmem [resolvable:$true] %s75
      %s77 = sshll.u32 %s2, 4
      %s78 = int_to_ptr.hbm [resolvable:$true] %s77
      %80 = dma.vmem_to_hbm [thread:$0]  %s76, 128, %s78, [#allocation4]
    $region21: #{tpu_custom_call.1} parent=1 // pred_fallthru
      _
    // Predicated region
    $region22: #{tpu_custom_call.1} parent=1 // pred_check
      _
    $region23: #{tpu_custom_call.1} parent=1 // pred_check_branch
      %82 = sbr.rel (0) target = $region25
    $region24: #{tpu_custom_call.1} parent=1 // pred_region
      %84 = dma.done [#allocation4], 128
    $region25: #{tpu_custom_call.1} parent=1 // pred_fallthru
      _
    %85 = vsyncpa [#allocation3], 1
    %86 = vsyncpa [#allocation6], 1
    %87 = vsyncpa [#allocation4], 1

</llo_original>
